<compile_context>
chip_gen: v5e
topology: v5e:2x2
jax: 0.10.0
libtpu: 0.0.40
codegen_flags: <defaults>
</compile_context>

<pallas_src>
import functools

import jax
import jax.numpy as jnp
from jax.experimental import pallas as pl
from jax.experimental.pallas import tpu as pltpu

_LANE = 128
_SUBLANE = 8


def _round_up(n, m):
    return (n + m - 1) // m * m


# ----------------------------------------------------------------------------
# Kernel
# ----------------------------------------------------------------------------
def _apply_activation(h, activation):
    if activation == "ReLU":
        return jnp.maximum(h, 0.0)
    elif activation == "LeakyReLU":
        # PyTorch default negative_slope = 0.01
        return jnp.where(h >= 0.0, h, 0.01 * h)
    elif activation == "Sigmoid":
        return jax.nn.sigmoid(h)
    else:
        raise ValueError(f"Activation of {activation} is not acceptable.")


def _mlp_kernel(*refs, num_layers, activation):
    """Fused MLP forward.

    refs layout: (x_ref, w0_ref, b0_ref, w1_ref, b1_ref, ..., o_ref)
    Hidden feature dims of the weights are lane-padded (inertly, with zeros);
    the input (emb) and output (num_classes) dims are natural width.
    """
    x_ref = refs[0]
    o_ref = refs[-1]
    param_refs = refs[1:-1]

    h = x_ref[...]
    for layer in range(num_layers):
        w = param_refs[2 * layer][...]
        b = param_refs[2 * layer + 1][...]          # f32, shape (1, out)
        # MXU matmul: operands in the weights' dtype (bf16 by default),
        # f32 accumulation.
        acc = jnp.dot(h.astype(w.dtype), w,
                      preferred_element_type=jnp.float32)
        acc = acc + b
        if layer < num_layers - 1:
            acc = _apply_activation(acc, activation)   # VPU/EUP, f32
        h = acc
    o_ref[...] = h.astype(o_ref.dtype)


# ----------------------------------------------------------------------------
# Parameter preparation (pad + cast ONCE, outside the forward path)
# ----------------------------------------------------------------------------
def prepare_params(weights, biases, compute_dtype=jnp.bfloat16):
    """Pad internal hidden dims to 128-lane multiples and cast weights once.

    Args:
      weights: list of [in_features, out_features] arrays (pre-transposed vs torch).
      biases:  list of [out_features] or [1, out_features] arrays.
      compute_dtype: matmul operand dtype (bf16 recommended; f32 for exact parity).
    Returns:
      list of (w_padded, b_padded) per layer.  Input (emb) and output
      (num_classes) feature dims are kept at natural width; only internal
      hidden dims are zero-padded to multiples of 128.
    """
    num_layers = len(weights)
    out_sizes = [w.shape[1] for w in weights]
    emb = weights[0].shape[0]
    # Only internal hidden dims get lane-padded; the final num_classes stays natural.
    padded_out = [
        _round_up(s, _LANE) if li < num_layers - 1 else s
        for li, s in enumerate(out_sizes)
    ]
    prepared = []
    for li, (w, b) in enumerate(zip(weights, biases)):
        in_dim = emb if li == 0 else padded_out[li - 1]
        w_p = jnp.zeros((in_dim, padded_out[li]), compute_dtype)
        w_p = w_p.at[: w.shape[0], : w.shape[1]].set(w.astype(compute_dtype))
        b2 = jnp.reshape(b, (1, -1)).astype(jnp.float32)
        b_p = jnp.zeros((1, padded_out[li]), jnp.float32)
        b_p = b_p.at[:, : b2.shape[1]].set(b2)
        prepared.append((w_p, b_p))
    return prepared


# ----------------------------------------------------------------------------
# Wrapper
# ----------------------------------------------------------------------------
def tsl_predictor_forward(x, prepared_params, *, activation="ReLU", block_m=None):
    """Forward pass of TSL_Predictor_Network.

    Args:
      x:               [batch, embedding_dim] (any float dtype; cast in-kernel).
      prepared_params: output of prepare_params(weights, biases, compute_dtype).
      activation:      'ReLU' | 'LeakyReLU' | 'Sigmoid' (hidden layers only).
      block_m:         batch tile override (rounded up to a multiple of 8).
    Returns:
      [batch, num_classes] float32 logits.
    """
    num_layers = len(prepared_params)
    batch, emb = x.shape
    assert prepared_params[0][0].shape[0] == emb, "embedding_dim mismatch"
    num_classes = prepared_params[-1][0].shape[1]

    # ---- batch tiling ----------------------------------------------------
    if block_m is None:
        block_m = min(2048, _round_up(batch, _SUBLANE))
        # Give the second v7x TensorCore work when the whole batch would
        # otherwise fit into a single tile (grid axis is 'parallel').
        if pl.cdiv(batch, block_m) < 2 and batch > _SUBLANE:
            block_m = _round_up(pl.cdiv(batch, 2), _SUBLANE)
    block_m = max(_SUBLANE, _round_up(block_m, _SUBLANE))
    grid = (pl.cdiv(batch, block_m),)   # ragged last tile -> Pallas boundary masking

    # ---- specs: natural-width x & output, resident (grid-invariant) params
    in_specs = [pl.BlockSpec((block_m, emb), lambda i: (i, 0))]
    flat_params = []
    for w_p, b_p in prepared_params:
        flat_params.extend([w_p, b_p])
        in_specs.append(pl.BlockSpec(w_p.shape, lambda i: (0, 0)))
        in_specs.append(pl.BlockSpec(b_p.shape, lambda i: (0, 0)))
    out_specs = pl.BlockSpec((block_m, num_classes), lambda i: (i, 0))

    # ---- cost estimate + VMEM budget --------------------------------------
    param_bytes = sum(int(p.size) * p.dtype.itemsize for p in flat_params)
    flops = 2 * batch * sum(int(w.shape[0]) * int(w.shape[1])
                            for w, _ in prepared_params)
    transc = (batch * sum(int(w.shape[1]) for w, _ in prepared_params[:-1])
              if activation == "Sigmoid" else 0)
    bytes_accessed = (int(x.size) * x.dtype.itemsize
                      + param_bytes
                      + batch * num_classes * 4)
    cost = pl.CostEstimate(flops=flops, transcendentals=transc,
                           bytes_accessed=bytes_accessed)

    widths = [emb] + [int(w.shape[1]) for w, _ in prepared_params]
    vmem_needed = (2 * block_m * emb * x.dtype.itemsize        # x tiles (dbl-buf)
                   + 2 * block_m * num_classes * 4             # out tiles (dbl-buf)
                   + 2 * param_bytes                           # resident params
                   + 2 * block_m * max(widths) * 4             # live f32 activations
                   + (4 << 20))                                # headroom
    try:
        vmem_cap = int(pltpu.get_tpu_info().vmem_capacity_bytes)
    except Exception:
        vmem_cap = 64 << 20   # conservative (v7x per-TC) fallback
    vmem_limit = int(min(max(vmem_needed, 32 << 20), vmem_cap - (8 << 20)))

    kernel = functools.partial(_mlp_kernel, num_layers=num_layers,
                               activation=activation)

    out = pl.pallas_call(
        kernel,
        out_shape=jax.ShapeDtypeStruct((batch, num_classes), jnp.float32),
        grid_spec=pltpu.PrefetchScalarGridSpec(
            num_scalar_prefetch=0,
            grid=grid,
            in_specs=in_specs,
            out_specs=out_specs,
        ),
        compiler_params=pltpu.CompilerParams(
            dimension_semantics=("parallel",),
            vmem_limit_bytes=vmem_limit,
        ),
        cost_estimate=cost,
    )(x, *flat_params)

    return out


# ----------------------------------------------------------------------------
# Deterministic parameter init (mirrors nn.Linear shapes; synthetic values)
# ----------------------------------------------------------------------------
def init_params(key, embedding_dim, num_classes, hidden_sizes):
    layer_sizes = [embedding_dim] + list(hidden_sizes) + [num_classes]
    weights, biases = [], []
    for i in range(len(layer_sizes) - 1):
        fan_in, fan_out = layer_sizes[i], layer_sizes[i + 1]
        key, kw, kb = jax.random.split(key, 3)
        bound = 1.0 / jnp.sqrt(fan_in)
        # torch Linear weight is [out, in]; we store transposed [in, out].
        w = jax.random.uniform(kw, (fan_in, fan_out), jnp.float32,
                               minval=-bound, maxval=bound)
        b = jax.random.uniform(kb, (1, fan_out), jnp.float32,
                               minval=-bound, maxval=bound)
        weights.append(w)
        biases.append(b)
    return weights, biases


def reference_forward(x, weights, biases, activation="ReLU"):
    h = x
    for i, (w, b) in enumerate(zip(weights, biases)):
        h = h @ w + jnp.reshape(b, (1, -1))
        if i < len(weights) - 1:
            h = _apply_activation(h, activation)
    return h


# ----------------------------------------------------------------------------
# Main
# ----------------------------------------------------------------------------
if __name__ == "__main__":
    embedding_dim = 32
    hidden_sizes = [64, 32]
    num_classes = 8

    key = jax.random.PRNGKey(0)
    key, kx = jax.random.split(key)
    weights, biases = init_params(key, embedding_dim, num_classes, hidden_sizes)

    batch = 16
    x = jax.random.normal(kx, (batch, embedding_dim), jnp.float32)
    ref = reference_forward(x, weights, biases, activation="ReLU")

    # 1) Exact-parity path: f32 operands.
    params_f32 = prepare_params(weights, biases, compute_dtype=jnp.float32)
    out_f32 = jax.block_until_ready(
        tsl_predictor_forward(x, params_f32, activation="ReLU"))
    assert out_f32.shape == (batch, num_classes)
    assert jnp.allclose(out_f32, ref, atol=1e-5, rtol=1e-5), \
        "mismatch vs reference (ReLU, f32)"

    # 2) Default fast path: bf16 operands, f32 accumulation (looser tolerance).
    params_bf16 = prepare_params(weights, biases)   # default bfloat16
    out_bf16 = jax.block_until_ready(
        tsl_predictor_forward(x, params_bf16, activation="ReLU"))
    assert out_bf16.shape == (batch, num_classes)
    assert jnp.allclose(out_bf16, ref, atol=2e-2, rtol=2e-2), \
        "mismatch vs reference (ReLU, bf16)"

    # 3) Odd batch (ragged boundary block) + Sigmoid (inert lane padding
    #    through the nonlinearity).
    key, kx2 = jax.random.split(key)
    x2 = jax.random.normal(kx2, (13, embedding_dim), jnp.float32)
    ref2 = reference_forward(x2, weights, biases, activation="Sigmoid")
    out2 = jax.block_until_ready(
        tsl_predictor_forward(x2, params_bf16, activation="Sigmoid"))
    assert out2.shape == (13, num_classes)
    assert jnp.allclose(out2, ref2, atol=2e-2, rtol=2e-2), \
        "mismatch vs reference (Sigmoid, bf16)"

    print("KERNEL_OK")
</pallas_src>

<mosaic_0001>
module attributes {stable_mosaic.version = 11 : i64} {
  func.func @_mlp_kernel(%arg0: i32, %arg1: memref<8x32xf32, #tpu.memory_space<vmem>>, %arg2: memref<32x128xf32, #tpu.memory_space<vmem>>, %arg3: memref<1x128xf32, #tpu.memory_space<vmem>>, %arg4: memref<128x128xf32, #tpu.memory_space<vmem>>, %arg5: memref<1x128xf32, #tpu.memory_space<vmem>>, %arg6: memref<128x8xf32, #tpu.memory_space<vmem>>, %arg7: memref<1x8xf32, #tpu.memory_space<vmem>>, %arg8: memref<8x8xf32, #tpu.memory_space<vmem>>) attributes {dimension_semantics = [#tpu.dimension_semantics<parallel>], iteration_bounds = array<i64: 2>, scalar_prefetch = 0 : i64, scratch_operands = 0 : i64, tpu.core_type = #tpu.core_type<tc>, window_params = [{transform_indices = @transform_0, window_bounds = array<i64: 8, 32>}, {pipeline_mode = #tpu.pipeline_mode<synchronous>, transform_indices = @transform_1, window_bounds = array<i64: 32, 128>}, {pipeline_mode = #tpu.pipeline_mode<synchronous>, transform_indices = @transform_2, window_bounds = array<i64: 1, 128>}, {pipeline_mode = #tpu.pipeline_mode<synchronous>, transform_indices = @transform_3, window_bounds = array<i64: 128, 128>}, {pipeline_mode = #tpu.pipeline_mode<synchronous>, transform_indices = @transform_4, window_bounds = array<i64: 1, 128>}, {pipeline_mode = #tpu.pipeline_mode<synchronous>, transform_indices = @transform_5, window_bounds = array<i64: 128, 8>}, {pipeline_mode = #tpu.pipeline_mode<synchronous>, transform_indices = @transform_6, window_bounds = array<i64: 1, 8>}, {transform_indices = @transform_7, window_bounds = array<i64: 8, 8>}]} {
    %c0 = arith.constant 0 : index
    %c0_0 = arith.constant 0 : index
    %0 = vector.load %arg1[%c0, %c0_0] : memref<8x32xf32, #tpu.memory_space<vmem>>, vector<8x32xf32>
    %c0_1 = arith.constant 0 : index
    %c0_2 = arith.constant 0 : index
    %1 = vector.load %arg2[%c0_1, %c0_2] : memref<32x128xf32, #tpu.memory_space<vmem>>, vector<32x128xf32>
    %c0_3 = arith.constant 0 : index
    %c0_4 = arith.constant 0 : index
    %2 = vector.load %arg3[%c0_3, %c0_4] : memref<1x128xf32, #tpu.memory_space<vmem>>, vector<1x128xf32>
    %cst = arith.constant dense<0.000000e+00> : vector<8x128xf32>
    %3 = tpu.matmul %0, %1, %cst {dimension_numbers = #tpu.dot_dimension_numbers<[1], [0], [0], [1], [0, 0, 1, 1], [], []>} : vector<8x32xf32>, vector<32x128xf32>, vector<8x128xf32> -> vector<8x128xf32>
    %4 = vector.broadcast %2 : vector<1x128xf32> to vector<8x128xf32>
    %5 = arith.addf %3, %4 : vector<8x128xf32>
    %cst_5 = arith.constant 0.000000e+00 : f32
    %6 = vector.broadcast %cst_5 : f32 to vector<8x128xf32>
    %7 = arith.maximumf %5, %6 : vector<8x128xf32>
    %c0_6 = arith.constant 0 : index
    %c0_7 = arith.constant 0 : index
    %8 = vector.load %arg4[%c0_6, %c0_7] : memref<128x128xf32, #tpu.memory_space<vmem>>, vector<128x128xf32>
    %c0_8 = arith.constant 0 : index
    %c0_9 = arith.constant 0 : index
    %9 = vector.load %arg5[%c0_8, %c0_9] : memref<1x128xf32, #tpu.memory_space<vmem>>, vector<1x128xf32>
    %cst_10 = arith.constant dense<0.000000e+00> : vector<8x128xf32>
    %10 = tpu.matmul %7, %8, %cst_10 {dimension_numbers = #tpu.dot_dimension_numbers<[1], [0], [0], [1], [0, 0, 1, 1], [], []>} : vector<8x128xf32>, vector<128x128xf32>, vector<8x128xf32> -> vector<8x128xf32>
    %11 = vector.broadcast %9 : vector<1x128xf32> to vector<8x128xf32>
    %12 = arith.addf %10, %11 : vector<8x128xf32>
    %cst_11 = arith.constant 0.000000e+00 : f32
    %13 = vector.broadcast %cst_11 : f32 to vector<8x128xf32>
    %14 = arith.maximumf %12, %13 : vector<8x128xf32>
    %c0_12 = arith.constant 0 : index
    %c0_13 = arith.constant 0 : index
    %15 = vector.load %arg6[%c0_12, %c0_13] : memref<128x8xf32, #tpu.memory_space<vmem>>, vector<128x8xf32>
    %c0_14 = arith.constant 0 : index
    %c0_15 = arith.constant 0 : index
    %16 = vector.load %arg7[%c0_14, %c0_15] : memref<1x8xf32, #tpu.memory_space<vmem>>, vector<1x8xf32>
    %cst_16 = arith.constant dense<0.000000e+00> : vector<8x8xf32>
    %17 = tpu.matmul %14, %15, %cst_16 {dimension_numbers = #tpu.dot_dimension_numbers<[1], [0], [0], [1], [0, 0, 1, 1], [], []>} : vector<8x128xf32>, vector<128x8xf32>, vector<8x8xf32> -> vector<8x8xf32>
    %18 = vector.broadcast %16 : vector<1x8xf32> to vector<8x8xf32>
    %19 = arith.addf %17, %18 : vector<8x8xf32>
    %c0_17 = arith.constant 0 : index
    %c0_18 = arith.constant 0 : index
    %20 = vector.load %arg8[%c0_17, %c0_18] : memref<8x8xf32, #tpu.memory_space<vmem>>, vector<8x8xf32>
    tpu.vector_store %arg8[%c0_17, %c0_18], %19 {strides = array<i32>} : memref<8x8xf32, #tpu.memory_space<vmem>>, vector<8x8xf32>,
    return
  }
  func.func @transform_0(%arg0: i32) -> (i32, i32) {
    %c0_i32 = arith.constant 0 : i32
    %c0_i32_0 = arith.constant 0 : i32
    return %arg0, %c0_i32 : i32, i32
  }
  func.func @transform_1(%arg0: i32) -> (i32, i32) {
    %c0_i32 = arith.constant 0 : i32
    %c0_i32_0 = arith.constant 0 : i32
    %c0_i32_1 = arith.constant 0 : i32
    return %c0_i32, %c0_i32_0 : i32, i32
  }
  func.func @transform_2(%arg0: i32) -> (i32, i32) {
    %c0_i32 = arith.constant 0 : i32
    %c0_i32_0 = arith.constant 0 : i32
    %c0_i32_1 = arith.constant 0 : i32
    return %c0_i32, %c0_i32_0 : i32, i32
  }
  func.func @transform_3(%arg0: i32) -> (i32, i32) {
    %c0_i32 = arith.constant 0 : i32
    %c0_i32_0 = arith.constant 0 : i32
    %c0_i32_1 = arith.constant 0 : i32
    return %c0_i32, %c0_i32_0 : i32, i32
  }
  func.func @transform_4(%arg0: i32) -> (i32, i32) {
    %c0_i32 = arith.constant 0 : i32
    %c0_i32_0 = arith.constant 0 : i32
    %c0_i32_1 = arith.constant 0 : i32
    return %c0_i32, %c0_i32_0 : i32, i32
  }
  func.func @transform_5(%arg0: i32) -> (i32, i32) {
    %c0_i32 = arith.constant 0 : i32
    %c0_i32_0 = arith.constant 0 : i32
    %c0_i32_1 = arith.constant 0 : i32
    return %c0_i32, %c0_i32_0 : i32, i32
  }
  func.func @transform_6(%arg0: i32) -> (i32, i32) {
    %c0_i32 = arith.constant 0 : i32
    %c0_i32_0 = arith.constant 0 : i32
    %c0_i32_1 = arith.constant 0 : i32
    return %c0_i32, %c0_i32_0 : i32, i32
  }
  func.func @transform_7(%arg0: i32) -> (i32, i32) {
    %c0_i32 = arith.constant 0 : i32
    %c0_i32_0 = arith.constant 0 : i32
    return %arg0, %c0_i32 : i32, i32
  }
}

</mosaic_0001>

<llo_original>
// kernel: tpu_custom_call.1
$region0: #{tpu_custom_call.1}
  #allocation0 [shape = 'u32[]', space=smem, size = 0x4, offset = 0x4, fixed_abs, tag = 'smem constant byte address 0x4 - core index']
  #allocation1 [shape = 'u32[72,128]{1,0:T(1,128)}', space=vmem, size = 0x9000, scoped, tag = 'internal scratch']
  %s0 = inlined_call_operand.hbm [shape: f32[16,32], index: 0, kind: input, shape index: {}]
  %s1 = inlined_call_operand.hbm [shape: f32[32,128], index: 1, kind: input, shape index: {}]
  %s2 = inlined_call_operand.vmem [shape: f32[1,128], index: 2, kind: input, shape index: {}]
  %s3 = inlined_call_operand.vmem [shape: f32[128,128], index: 3, kind: input, shape index: {}]
  %s4 = inlined_call_operand.vmem [shape: f32[1,128], index: 4, kind: input, shape index: {}]
  %s5 = inlined_call_operand.vmem [shape: f32[128,8], index: 5, kind: input, shape index: {}]
  %s6 = inlined_call_operand.vmem [shape: f32[1,8], index: 6, kind: input, shape index: {}]
  %s7 = inlined_call_operand.vmem [shape: f32[16,8], index: 7, kind: output, shape index: {}]
  %s8 = sld [smem:[#allocation0]]
  $region69: #{tpu_custom_call.1} parent=0
    _
  %s10 = ssub.s32 1, %s8
  %s11 = scalar_select 0, %s10, %s8
  $region1: #{tpu_custom_call.1} parent=0
    #allocation2 [shape = 'u8[8192]{0}', space=vmem, size = 0x2000, scoped, tag = 'input window, operand 0']
    #allocation3 [shape = 's32[2]{0}', space=sflag, size = 0x8, scoped, tag = 'scoped memory for tpu_custom_call.1']
    #allocation4 [shape = 'u8[16384]{0}', space=vmem, size = 0x4000, scoped, tag = 'input window, operand 1, single buffered']
    #allocation5 [shape = 's32[1]{0}', space=sflag, size = 0x4, scoped, tag = 'scoped memory for tpu_custom_call.1']
    %12 = vsyncpa [#allocation3], 0
    %s13 = scalar_lea.sflag [#allocation3], 1
    %14 = vsyncpa %s13, 0
    %15 = vsyncpa [#allocation5], 0
    loop: start=0, step=1, limit=4
    $region2: #{tpu_custom_call.1} parent=1 // loop_pre_header
      _
    $region3: #{tpu_custom_call.1} parent=1 // loop_header
      %s17 = sphi 0, %s21
      %p18 = scmp.ge.s32.totalorder %s17, 4
      %s27 = sphi 0, %s29
      %s30 = sphi 0, %s27
      %s31 = sphi 0, %s30
      %s47 = sphi 0, %s31
      %s51 = sphi 0, %s51
      %s53 = sphi 0, %s51
      %s54 = sphi 0, %s53
      %s68 = sphi 0, %s54
      %s72 = sphi 0, %s72
      %s74 = sphi 0, %s72
      %s75 = sphi 0, %s74
      %s89 = sphi 0, %s75
      %s93 = sphi 0, %s93
      %s95 = sphi 0, %s93
      %s96 = sphi 0, %s95
      %s110 = sphi 0, %s96
      %s114 = sphi 0, %s114
      %s116 = sphi 0, %s114
      %s117 = sphi 0, %s116
      %s131 = sphi 0, %s117
      %s135 = sphi 0, %s135
      %s137 = sphi 0, %s135
      %s138 = sphi 0, %s137
      %s152 = sphi 0, %s138
      %s156 = sphi 0, %s156
      %s158 = sphi 0, %s156
      %s159 = sphi 0, %s158
      %s173 = sphi 0, %s159
      %s179 = sphi 0, %s181
      %s182 = sphi 0, %s179
      %s183 = sphi 0, %s182
      %s199 = sphi 0, %s183
    $region4: #{tpu_custom_call.1} parent=1 // loop_header_branch
      %20 = sbr.rel (%p18) target = $region8
    $region5: #{tpu_custom_call.1} parent=1 // loop_body
      %s22 = ssub.s32 %s17, 1
      %s23 = ssub.s32 %s17, 2
      %s24 = sadd.s32 %s17, 1
      %s25 = ssub.s32 %s17, %s24
      %p26 = scmp.eq.s32.totalorder %s25, 0
      %s28 = sadd.s32 %s27, 1
      %s29 = scalar_select %p26, %s27, %s28
      %p32 = pneg %p26
      %p33 = scmp.eq.s32.totalorder %s17, 1
      %p34 = por %p32, %p33
      %p35 = scmp.ne.s32.totalorder %s27, %s30
      %p36 = scmp.eq.s32.totalorder %s17, 0
      %p37 = por %p35, %p36
      %p38 = scmp.ne.s32.totalorder %s27, %s30
      %p39 = scmp.eq.s32.totalorder %s22, 1
      %p40 = por %p38, %p39
      %p41 = scmp.ne.s32.totalorder %s30, %s31
      %p42 = scmp.eq.s32.totalorder %s22, 0
      %p43 = por %p41, %p42
      %p44 = scmp.ne.s32.totalorder %s30, %s31
      %p45 = scmp.eq.s32.totalorder %s23, 1
      %p46 = por %p44, %p45
      %p48 = scmp.ne.s32.totalorder %s31, %s47
      %p49 = scmp.eq.s32.totalorder %s23, 0
      %p50 = por %p48, %p49
      %s52 = sadd.s32 %s51, 1
      %p55 = scmp.eq.s32.totalorder %s17, 1
      %p56 = scmp.ne.s32.totalorder %s51, %s53
      %p57 = scmp.eq.s32.totalorder %s17, 0
      %p58 = por %p56, %p57
      %p59 = scmp.ne.s32.totalorder %s51, %s53
      %p60 = scmp.eq.s32.totalorder %s22, 1
      %p61 = por %p59, %p60
      %p62 = scmp.ne.s32.totalorder %s53, %s54
      %p63 = scmp.eq.s32.totalorder %s22, 0
      %p64 = por %p62, %p63
      %p65 = scmp.ne.s32.totalorder %s53, %s54
      %p66 = scmp.eq.s32.totalorder %s23, 1
      %p67 = por %p65, %p66
      %p69 = scmp.ne.s32.totalorder %s54, %s68
      %p70 = scmp.eq.s32.totalorder %s23, 0
      %p71 = por %p69, %p70
      %s73 = sadd.s32 %s72, 1
      %p76 = scmp.eq.s32.totalorder %s17, 1
      %p77 = scmp.ne.s32.totalorder %s72, %s74
      %p78 = scmp.eq.s32.totalorder %s17, 0
      %p79 = por %p77, %p78
      %p80 = scmp.ne.s32.totalorder %s72, %s74
      %p81 = scmp.eq.s32.totalorder %s22, 1
      %p82 = por %p80, %p81
      %p83 = scmp.ne.s32.totalorder %s74, %s75
      %p84 = scmp.eq.s32.totalorder %s22, 0
      %p85 = por %p83, %p84
      %p86 = scmp.ne.s32.totalorder %s74, %s75
      %p87 = scmp.eq.s32.totalorder %s23, 1
      %p88 = por %p86, %p87
      %p90 = scmp.ne.s32.totalorder %s75, %s89
      %p91 = scmp.eq.s32.totalorder %s23, 0
      %p92 = por %p90, %p91
      %s94 = sadd.s32 %s93, 1
      %p97 = scmp.eq.s32.totalorder %s17, 1
      %p98 = scmp.ne.s32.totalorder %s93, %s95
      %p99 = scmp.eq.s32.totalorder %s17, 0
      %p100 = por %p98, %p99
      %p101 = scmp.ne.s32.totalorder %s93, %s95
      %p102 = scmp.eq.s32.totalorder %s22, 1
      %p103 = por %p101, %p102
      %p104 = scmp.ne.s32.totalorder %s95, %s96
      %p105 = scmp.eq.s32.totalorder %s22, 0
      %p106 = por %p104, %p105
      %p107 = scmp.ne.s32.totalorder %s95, %s96
      %p108 = scmp.eq.s32.totalorder %s23, 1
      %p109 = por %p107, %p108
      %p111 = scmp.ne.s32.totalorder %s96, %s110
      %p112 = scmp.eq.s32.totalorder %s23, 0
      %p113 = por %p111, %p112
      %s115 = sadd.s32 %s114, 1
      %p118 = scmp.eq.s32.totalorder %s17, 1
      %p119 = scmp.ne.s32.totalorder %s114, %s116
      %p120 = scmp.eq.s32.totalorder %s17, 0
      %p121 = por %p119, %p120
      %p122 = scmp.ne.s32.totalorder %s114, %s116
      %p123 = scmp.eq.s32.totalorder %s22, 1
      %p124 = por %p122, %p123
      %p125 = scmp.ne.s32.totalorder %s116, %s117
      %p126 = scmp.eq.s32.totalorder %s22, 0
      %p127 = por %p125, %p126
      %p128 = scmp.ne.s32.totalorder %s116, %s117
      %p129 = scmp.eq.s32.totalorder %s23, 1
      %p130 = por %p128, %p129
      %p132 = scmp.ne.s32.totalorder %s117, %s131
      %p133 = scmp.eq.s32.totalorder %s23, 0
      %p134 = por %p132, %p133
      %s136 = sadd.s32 %s135, 1
      %p139 = scmp.eq.s32.totalorder %s17, 1
      %p140 = scmp.ne.s32.totalorder %s135, %s137
      %p141 = scmp.eq.s32.totalorder %s17, 0
      %p142 = por %p140, %p141
      %p143 = scmp.ne.s32.totalorder %s135, %s137
      %p144 = scmp.eq.s32.totalorder %s22, 1
      %p145 = por %p143, %p144
      %p146 = scmp.ne.s32.totalorder %s137, %s138
      %p147 = scmp.eq.s32.totalorder %s22, 0
      %p148 = por %p146, %p147
      %p149 = scmp.ne.s32.totalorder %s137, %s138
      %p150 = scmp.eq.s32.totalorder %s23, 1
      %p151 = por %p149, %p150
      %p153 = scmp.ne.s32.totalorder %s138, %s152
      %p154 = scmp.eq.s32.totalorder %s23, 0
      %p155 = por %p153, %p154
      %s157 = sadd.s32 %s156, 1
      %p160 = scmp.eq.s32.totalorder %s17, 1
      %p161 = scmp.ne.s32.totalorder %s156, %s158
      %p162 = scmp.eq.s32.totalorder %s17, 0
      %p163 = por %p161, %p162
      %p164 = scmp.ne.s32.totalorder %s156, %s158
      %p165 = scmp.eq.s32.totalorder %s22, 1
      %p166 = por %p164, %p165
      %p167 = scmp.ne.s32.totalorder %s158, %s159
      %p168 = scmp.eq.s32.totalorder %s22, 0
      %p169 = por %p167, %p168
      %p170 = scmp.ne.s32.totalorder %s158, %s159
      %p171 = scmp.eq.s32.totalorder %s23, 1
      %p172 = por %p170, %p171
      %p174 = scmp.ne.s32.totalorder %s159, %s173
      %p175 = scmp.eq.s32.totalorder %s23, 0
      %p176 = por %p174, %p175
      %s177 = ssub.s32 %s17, %s24
      %p178 = scmp.eq.s32.totalorder %s177, 0
      %s180 = sadd.s32 %s179, 1
      %s181 = scalar_select %p178, %s179, %s180
      %p184 = pneg %p178
      %p185 = scmp.eq.s32.totalorder %s17, 1
      %p186 = por %p184, %p185
      %p187 = scmp.ne.s32.totalorder %s179, %s182
      %p188 = scmp.eq.s32.totalorder %s17, 0
      %p189 = por %p187, %p188
      %p190 = scmp.ne.s32.totalorder %s179, %s182
      %p191 = scmp.eq.s32.totalorder %s22, 1
      %p192 = por %p190, %p191
      %p193 = scmp.ne.s32.totalorder %s182, %s183
      %p194 = scmp.eq.s32.totalorder %s22, 0
      %p195 = por %p193, %p194
      %p196 = scmp.ne.s32.totalorder %s182, %s183
      %p197 = scmp.eq.s32.totalorder %s23, 1
      %p198 = por %p196, %p197
      %p200 = scmp.ne.s32.totalorder %s183, %s199
      %p201 = scmp.eq.s32.totalorder %s23, 0
      %p202 = por %p200, %p201
      %p203 = scmp.le.s32.totalorder 1, %s17
      %p204 = scmp.lt.s32.totalorder %s17, 3
      %p205 = pnand %p203, %p204
      %p206 = pneg %p205
      // Predicated region
      $region9: #{tpu_custom_call.1} parent=5 // pred_check
        _
      $region10: #{tpu_custom_call.1} parent=5 // pred_check_branch
        %208 = sbr.rel (%p205) target = $region12
      $region11: #{tpu_custom_call.1} parent=5 // pred_region
        %s209 = ssub.s32 %s17, 1
        // Predicated region
        $region13: #{tpu_custom_call.1} parent=11 // pred_check
          %p210 = pneg %p64
        $region14: #{tpu_custom_call.1} parent=11 // pred_check_branch
          %212 = sbr.rel (%p210) target = $region16
        $region15: #{tpu_custom_call.1} parent=11 // pred_region
          %214 = vsyncadd [#allocation5], 0
          %s215 = sshll.u32 %s1, 4
          %s216 = int_to_ptr.hbm [resolvable:$true] %s215
          %s217 = sshll.u32 [#allocation4], 4
          %s218 = int_to_ptr.vmem [resolvable:$true] %s217
          %223 = dma.hbm_to_vmem [thread:$0]  %s216, 512, %s218, [#allocation5], 128, 128, 8
        $region16: #{tpu_custom_call.1} parent=11 // pred_fallthru
          _
        // Predicated region
        $region17: #{tpu_custom_call.1} parent=11 // pred_check
          %p224 = pneg %p85
        $region18: #{tpu_custom_call.1} parent=11 // pred_check_branch
          %226 = sbr.rel (%p224) target = $region20
        $region19: #{tpu_custom_call.1} parent=11 // pred_region
          _
        $region20: #{tpu_custom_call.1} parent=11 // pred_fallthru
          _
        // Predicated region
        $region21: #{tpu_custom_call.1} parent=11 // pred_check
          %p227 = pneg %p106
        $region22: #{tpu_custom_call.1} parent=11 // pred_check_branch
          %229 = sbr.rel (%p227) target = $region24
        $region23: #{tpu_custom_call.1} parent=11 // pred_region
          _
        $region24: #{tpu_custom_call.1} parent=11 // pred_fallthru
          _
        // Predicated region
        $region25: #{tpu_custom_call.1} parent=11 // pred_check
          %p230 = pneg %p127
        $region26: #{tpu_custom_call.1} parent=11 // pred_check_branch
          %232 = sbr.rel (%p230) target = $region28
        $region27: #{tpu_custom_call.1} parent=11 // pred_region
          _
        $region28: #{tpu_custom_call.1} parent=11 // pred_fallthru
          _
        // Predicated region
        $region29: #{tpu_custom_call.1} parent=11 // pred_check
          %p233 = pneg %p148
        $region30: #{tpu_custom_call.1} parent=11 // pred_check_branch
          %235 = sbr.rel (%p233) target = $region32
        $region31: #{tpu_custom_call.1} parent=11 // pred_region
          _
        $region32: #{tpu_custom_call.1} parent=11 // pred_fallthru
          _
        // Predicated region
        $region33: #{tpu_custom_call.1} parent=11 // pred_check
          %p236 = pneg %p169
        $region34: #{tpu_custom_call.1} parent=11 // pred_check_branch
          %238 = sbr.rel (%p236) target = $region36
        $region35: #{tpu_custom_call.1} parent=11 // pred_region
          _
        $region36: #{tpu_custom_call.1} parent=11 // pred_fallthru
          _
      $region12: #{tpu_custom_call.1} parent=5 // pred_fallthru
        _
      %p239 = scmp.lt.s32.totalorder %s17, 2
      // Predicated region
      $region37: #{tpu_custom_call.1} parent=5 // pred_check
        %p240 = pneg %p239
      $region38: #{tpu_custom_call.1} parent=5 // pred_check_branch
        %242 = sbr.rel (%p240) target = $region40
      $region39: #{tpu_custom_call.1} parent=5 // pred_region
        // Predicated region
        $region41: #{tpu_custom_call.1} parent=39 // pred_check
          %p243 = pneg %p37
        $region42: #{tpu_custom_call.1} parent=39 // pred_check_branch
          %245 = sbr.rel (%p243) target = $region44
        $region43: #{tpu_custom_call.1} parent=39 // pred_region
          %s246 = sand.u32 %s27, 1
          %s247 = scalar_lea.sflag [#allocation3], %s246
          %s248 = sand.u32 %s27, 1
          %s249 = smul.addr %s248, 8
          %s250 = scalar_lea.vmem [#allocation2], %s249
          %252 = vsyncadd %s247, 0
          %s253 = smul.addr %s17, 8
          %s254 = scalar_lea.hbm %s0, %s253
          %s256 = sshll.u32 %s254, 4
          %s257 = int_to_ptr.hbm [resolvable:$true] %s256
          %s258 = sshll.u32 %s250, 4
          %s259 = int_to_ptr.vmem [resolvable:$true] %s258
          %261 = dma.hbm_to_vmem [thread:$0]  %s257, 128, %s259, %s247
        $region44: #{tpu_custom_call.1} parent=39 // pred_fallthru
          _
      $region40: #{tpu_custom_call.1} parent=5 // pred_fallthru
        _
      %p262 = scmp.le.s32.totalorder 1, %s17
      %p263 = scmp.lt.s32.totalorder %s17, 3
      %p264 = pnand %p262, %p263
      %p265 = pneg %p264
      // Predicated region
      $region45: #{tpu_custom_call.1} parent=5 // pred_check
        _
      $region46: #{tpu_custom_call.1} parent=5 // pred_check_branch
        %267 = sbr.rel (%p264) target = $region48
      $region47: #{tpu_custom_call.1} parent=5 // pred_region
        %s268 = ssub.s32 %s17, 1
        %s269 = sand.u32 %s30, 1
        %s270 = scalar_lea.sflag [#allocation3], %s269
        %s271 = sand.u32 %s30, 1
        %s272 = smul.addr %s271, 8
        %s273 = scalar_lea.vmem [#allocation2], %s272
        // Predicated region
        $region49: #{tpu_custom_call.1} parent=47 // pred_check
          %p274 = pneg %p43
        $region50: #{tpu_custom_call.1} parent=47 // pred_check_branch
          %276 = sbr.rel (%p274) target = $region52
        $region51: #{tpu_custom_call.1} parent=47 // pred_region
          %278 = dma.done %s270, 128
        $region52: #{tpu_custom_call.1} parent=47 // pred_fallthru
          _
        // Predicated region
        $region53: #{tpu_custom_call.1} parent=47 // pred_check
          %p279 = pneg %p64
        $region54: #{tpu_custom_call.1} parent=47 // pred_check_branch
          %281 = sbr.rel (%p279) target = $region56
        $region55: #{tpu_custom_call.1} parent=47 // pred_region
          %283 = dma.done [#allocation5], 512
        $region56: #{tpu_custom_call.1} parent=47 // pred_fallthru
          _
        %s284 = sand.u32 %s30, 1
        %s285 = scalar_lea.sflag [#allocation3], %s284
        %s286 = sand.u32 %s30, 1
        %s287 = smul.addr %s286, 8
        %s288 = scalar_lea.vmem [#allocation2], %s287
        %p289 = pneg %p43
        %p290 = pneg %p40
        %p291 = pneg %p64
        %p292 = pneg %p61
        %p293 = pneg %p85
        %p294 = pneg %p82
        %p295 = pneg %p106
        %p296 = pneg %p103
        %p297 = pneg %p127
        %p298 = pneg %p124
        %p299 = pneg %p148
        %p300 = pneg %p145
        %p301 = pneg %p169
        %p302 = pneg %p166
        %p303 = pneg %p195
        %p304 = pneg %p192
        %p305 = scmp.lt.s32.totalorder %s22, 1
        %s306 = scalar_select %p305, %s22, 1
        %s307 = smul.addr %s306, 8
        %s308 = scalar_lea.vmem %s7, %s307
        %p309 = scmp.lt.s32.totalorder %s22, 1
        %s310 = scalar_select %p309, %s22, 1
        %s311 = smul.addr %s310, 8
        %s312 = scalar_lea.vmem %s7, %s311
        %v313 = vld [vmem:[%s273] sm:$0xff]
        %v314 = vld [vmem:[#allocation4] sm:$0xff]
        %v315 = vld [vmem:[#allocation4 + $0x8] sm:$0xff]
        %v316 = vld [vmem:[#allocation4 + $0x10] sm:$0xff]
        %v317 = vld [vmem:[#allocation4 + $0x18] sm:$0xff]
        %v318 = vld [vmem:[%s2] sm:$0x1]
        %v320 = vperm.slane %v318, 0
        %vm322 = vcmask 261120
        %v324 = vsel %vm322, %v313, 0
        %326 = vmatpush.msra.mxu0 0.0
        %327 = vmatpush.msra.mxu0 0.0
        %328 = vmatpush.msra.mxu0 0.0
        %329 = vmatpush.msra.mxu0 0.0
        %330 = vmatpush.msra.mxu0 0.0
        %331 = vmatpush.msra.mxu0 0.0
        %332 = vmatpush.msra.mxu0 0.0
        %333 = vmatpush.msra.mxu0 0.0
        %334 = vmatpush.msra.mxu0 0.0
        %335 = vmatpush.msra.mxu0 0.0
        %336 = vmatpush.msra.mxu0 0.0
        %337 = vmatpush.msra.mxu0 0.0
        %338 = vmatpush.msra.mxu0 %v317
        %339 = vmatpush.msra.mxu0 %v316
        %340 = vmatpush.msra.mxu0 %v315
        %341 = vmatpush.msra.mxu0 %v314
        %342 = vmatmul.f32.gmra.mxu0 %v324
        %v343 = vpop.f32.mrf.mxu0
        %v344 = vadd.f32 %v320, %v343
        %345 = vdwg.mxu0
        %v346 = vmax.f32 %v344, 0.0
        %v347 = vld [vmem:[%s3] sm:$0xff]
        %v348 = vld [vmem:[%s3 + $0x8] sm:$0xff]
        %v349 = vld [vmem:[%s3 + $0x10] sm:$0xff]
        %v350 = vld [vmem:[%s3 + $0x18] sm:$0xff]
        %v351 = vld [vmem:[%s3 + $0x20] sm:$0xff]
        %v352 = vld [vmem:[%s3 + $0x28] sm:$0xff]
        %v353 = vld [vmem:[%s3 + $0x30] sm:$0xff]
        %v354 = vld [vmem:[%s3 + $0x38] sm:$0xff]
        %v355 = vld [vmem:[%s3 + $0x40] sm:$0xff]
        %v356 = vld [vmem:[%s3 + $0x48] sm:$0xff]
        %v357 = vld [vmem:[%s3 + $0x50] sm:$0xff]
        %v358 = vld [vmem:[%s3 + $0x58] sm:$0xff]
        %v359 = vld [vmem:[%s3 + $0x60] sm:$0xff]
        %v360 = vld [vmem:[%s3 + $0x68] sm:$0xff]
        %v361 = vld [vmem:[%s3 + $0x70] sm:$0xff]
        %v362 = vld [vmem:[%s3 + $0x78] sm:$0xff]
        %v363 = vld [vmem:[%s4] sm:$0x1]
        %v365 = vperm.slane %v363, 0
        %367 = vmatpush.msra.mxu0 %v362
        %368 = vmatpush.msra.mxu0 %v361
        %369 = vmatpush.msra.mxu0 %v360
        %370 = vmatpush.msra.mxu0 %v359
        %371 = vmatpush.msra.mxu0 %v358
        %372 = vmatpush.msra.mxu0 %v357
        %373 = vmatpush.msra.mxu0 %v356
        %374 = vmatpush.msra.mxu0 %v355
        %375 = vmatpush.msra.mxu0 %v354
        %376 = vmatpush.msra.mxu0 %v353
        %377 = vmatpush.msra.mxu0 %v352
        %378 = vmatpush.msra.mxu0 %v351
        %379 = vmatpush.msra.mxu0 %v350
        %380 = vmatpush.msra.mxu0 %v349
        %381 = vmatpush.msra.mxu0 %v348
        %382 = vmatpush.msra.mxu0 %v347
        %383 = vmatmul.f32.gmra.mxu0 %v346
        %v384 = vpop.f32.mrf.mxu0
        %v385 = vadd.f32 %v365, %v384
        %386 = vdwg.mxu0
        %v387 = vmax.f32 %v385, 0.0
        %v388 = vld [vmem:[%s5] sm:$0xff]
        %v389 = vld [vmem:[%s5 + $0x8] sm:$0xff]
        %v390 = vld [vmem:[%s5 + $0x10] sm:$0xff]
        %v391 = vld [vmem:[%s5 + $0x18] sm:$0xff]
        %v392 = vld [vmem:[%s5 + $0x20] sm:$0xff]
        %v393 = vld [vmem:[%s5 + $0x28] sm:$0xff]
        %v394 = vld [vmem:[%s5 + $0x30] sm:$0xff]
        %v395 = vld [vmem:[%s5 + $0x38] sm:$0xff]
        %v396 = vld [vmem:[%s5 + $0x40] sm:$0xff]
        %v397 = vld [vmem:[%s5 + $0x48] sm:$0xff]
        %v398 = vld [vmem:[%s5 + $0x50] sm:$0xff]
        %v399 = vld [vmem:[%s5 + $0x58] sm:$0xff]
        %v400 = vld [vmem:[%s5 + $0x60] sm:$0xff]
        %v401 = vld [vmem:[%s5 + $0x68] sm:$0xff]
        %v402 = vld [vmem:[%s5 + $0x70] sm:$0xff]
        %v403 = vld [vmem:[%s5 + $0x78] sm:$0xff]
        %v404 = vld [vmem:[%s6] sm:$0x1]
        %v406 = vperm.slane %v404, 0
        %408 = vmatpush.msra.mxu0 %v403
        %409 = vmatpush.msra.mxu0 %v402
        %410 = vmatpush.msra.mxu0 %v401
        %411 = vmatpush.msra.mxu0 %v400
        %412 = vmatpush.msra.mxu0 %v399
        %413 = vmatpush.msra.mxu0 %v398
        %414 = vmatpush.msra.mxu0 %v397
        %415 = vmatpush.msra.mxu0 %v396
        %416 = vmatpush.msra.mxu0 %v395
        %417 = vmatpush.msra.mxu0 %v394
        %418 = vmatpush.msra.mxu0 %v393
        %419 = vmatpush.msra.mxu0 %v392
        %420 = vmatpush.msra.mxu0 %v391
        %421 = vmatpush.msra.mxu0 %v390
        %422 = vmatpush.msra.mxu0 %v389
        %423 = vmatpush.msra.mxu0 %v388
        %424 = vmatmul.f32.gmra.mxu0 %v387
        %v425 = vpop.f32.mrf.mxu0
        %v426 = vadd.f32 %v406, %v425
        %427 = vdwg.mxu0
        %vm428 = vcmask 64512
        %429 = vst.msk [vmem:[%s312] sm:$0xff] %vm428, %v426
        %p430 = scmp.lt.s32.totalorder %s22, 1
        %s431 = scalar_select %p430, %s22, 1
        %s432 = smul.addr %s431, 8
        %s433 = scalar_lea.vmem %s7, %s432
        // Predicated region
        $region57: #{tpu_custom_call.1} parent=47 // pred_check
          %p434 = pneg %p192
        $region58: #{tpu_custom_call.1} parent=47 // pred_check_branch
          %436 = sbr.rel (%p434) target = $region60
        $region59: #{tpu_custom_call.1} parent=47 // pred_region
          _
        $region60: #{tpu_custom_call.1} parent=47 // pred_fallthru
          _
      $region48: #{tpu_custom_call.1} parent=5 // pred_fallthru
        _
      %p437 = scmp.le.s32.totalorder 2, %s17
      // Predicated region
      $region61: #{tpu_custom_call.1} parent=5 // pred_check
        %p438 = pneg %p437
      $region62: #{tpu_custom_call.1} parent=5 // pred_check_branch
        %440 = sbr.rel (%p438) target = $region64
      $region63: #{tpu_custom_call.1} parent=5 // pred_region
        %s441 = ssub.s32 %s17, 2
        // Predicated region
        $region65: #{tpu_custom_call.1} parent=63 // pred_check
          %p442 = pneg %p198
        $region66: #{tpu_custom_call.1} parent=63 // pred_check_branch
          %444 = sbr.rel (%p442) target = $region68
        $region67: #{tpu_custom_call.1} parent=63 // pred_region
          %p445 = scmp.lt.s32.totalorder %s23, 1
          %s446 = scalar_select %p445, %s23, 1
          %s447 = smul.addr %s446, 8
          %s448 = scalar_lea.vmem %s7, %s447
        $region68: #{tpu_custom_call.1} parent=63 // pred_fallthru
          _
      $region64: #{tpu_custom_call.1} parent=5 // pred_fallthru
        _
    $region6: #{tpu_custom_call.1} parent=1 // loop_footer
      %s21 = sadd.s32 1, %s17
    $region7: #{tpu_custom_call.1} parent=1 // loop_footer_branch
      %16 = sbr.rel target = $region3
    $region8: #{tpu_custom_call.1} parent=1 // loop_exit
      _
    %449 = vsyncpa [#allocation3], 1
    %s450 = scalar_lea.sflag [#allocation3], 1
    %451 = vsyncpa %s450, 1
    %452 = vsyncpa [#allocation5], 1

</llo_original>
